<compile_context>
chip_gen: v6e
topology: v6e:2x2x1
jax: 0.10.0
libtpu: 0.0.40
codegen_flags: <defaults>
</compile_context>

<pallas_src>
import jax
import jax.numpy as jnp
from jax.experimental import pallas as pl
from jax.experimental.pallas import tpu as pltpu

_LANES = 128
_SMALL_N = 1 << 16  # below this a fused jnp expression beats any pallas_call


def _sq_diff_sum_kernel(gt_ref, pred_ref, out_ref, acc_ref):
    """Streams (block_rows, 128) tiles; accumulates sum((gt - pred)^2).

    acc_ref is an (8, 128) f32 VMEM scratch: per-step work is pure VPU
    (subtract / multiply / vreg adds) and hides under the input DMAs; the
    single cross-lane reduce runs once per split on the last step.
    """
    step = pl.program_id(1)

    @pl.when(step == 0)
    def _():
        acc_ref[...] = jnp.zeros_like(acc_ref)

    diff = gt_ref[...].astype(jnp.float32) - pred_ref[...].astype(jnp.float32)
    sq = diff * diff
    acc_ref[...] += sq.reshape(-1, 8, _LANES).sum(axis=0)

    @pl.when(step == pl.num_programs(1) - 1)
    def _():
        out_ref[...] = jnp.sum(acc_ref[...], keepdims=True)


def _sq_diff_sum_jnp(gt, pred):
    d = gt.astype(jnp.float32) - pred.astype(jnp.float32)
    return jnp.sum(d * d)


def mse_loss(angle_gt: jax.Array, angle: jax.Array,
             *, block_rows: int = 4096, num_splits: int = 1) -> jax.Array:
    """Pallas equivalent of MSELoss.forward: mean_B(sum_D((gt-pred)^2)) * 10."""
    assert angle_gt.shape == angle.shape and angle_gt.ndim == 2
    B = angle_gt.shape[0]
    n = angle_gt.size
    scale = jnp.float32(10.0 / B)

    gt_flat = angle_gt.reshape(-1)
    pr_flat = angle.reshape(-1)

    # Small-size fast path: pallas_call launch overhead dominates here.
    if n < _SMALL_N:
        return _sq_diff_sum_jnp(gt_flat, pr_flat) * scale

    # dtype-aware sublane alignment: f32 -> 8, bf16 -> 16, int8/fp8 -> 32.
    itemsize = min(jnp.dtype(angle_gt.dtype).itemsize,
                   jnp.dtype(angle.dtype).itemsize)
    sub = 8 * max(1, 4 // int(itemsize))

    rows_full = n // _LANES                       # full 128-lane rows
    block_rows = max(sub, min(block_rows, rows_full // max(1, num_splits)))
    block_rows = (block_rows // sub) * sub
    steps = rows_full // (num_splits * block_rows) if block_rows > 0 else 0
    if steps == 0:
        return _sq_diff_sum_jnp(gt_flat, pr_flat) * scale

    kern_rows = num_splits * steps * block_rows
    kern_elems = kern_rows * _LANES

    # Lane-dense relayout: zero-copy reshape when everything tiles exactly;
    # otherwise the kernel streams the full tiles and the small ragged tail
    # is added with a tiny jnp expression (no padded HBM copies).
    if kern_elems == n:
        gt_slab = gt_flat.reshape(kern_rows, _LANES)
        pr_slab = pr_flat.reshape(kern_rows, _LANES)
        tail = jnp.float32(0.0)
    else:
        gt_slab = gt_flat[:kern_elems].reshape(kern_rows, _LANES)
        pr_slab = pr_flat[:kern_elems].reshape(kern_rows, _LANES)
        tail = _sq_diff_sum_jnp(gt_flat[kern_elems:], pr_flat[kern_elems:])

    in_spec = pl.BlockSpec((block_rows, _LANES),
                           lambda c, i: (c * steps + i, 0))

    bytes_accessed = kern_elems * (jnp.dtype(angle_gt.dtype).itemsize
                                   + jnp.dtype(angle.dtype).itemsize) \
        + num_splits * 4

    partials = pl.pallas_call(
        _sq_diff_sum_kernel,
        out_shape=jax.ShapeDtypeStruct((num_splits, 1), jnp.float32),
        grid=(num_splits, steps),
        in_specs=[in_spec, in_spec],
        out_specs=pl.BlockSpec((1, 1), lambda c, i: (c, 0)),
        scratch_shapes=[pltpu.VMEM((8, _LANES), jnp.float32)],
        compiler_params=pltpu.CompilerParams(
            dimension_semantics=("parallel", "arbitrary")),
        cost_estimate=pl.CostEstimate(flops=3 * kern_elems,
                                      transcendentals=0,
                                      bytes_accessed=bytes_accessed),
    )(gt_slab, pr_slab)

    # mean over batch of per-sample sums, times 10  ==  total_sum * (10 / B)
    return (jnp.sum(partials) + tail) * scale


if __name__ == "__main__":
    def ref_loss(gt, pr):
        gt = gt.astype(jnp.float32)
        pr = pr.astype(jnp.float32)
        return jnp.mean(jnp.sum((gt - pr) ** 2, axis=1)) * 10.0

    # 1) The training shape implied by the module (batch=8, angle dim=3):
    #    exercises the small-size fast path.
    k1, k2 = jax.random.split(jax.random.PRNGKey(0))
    gt = jax.random.normal(k1, (8, 3), dtype=jnp.float32)
    pr = jax.random.normal(k2, (8, 3), dtype=jnp.float32)
    out = mse_loss(gt, pr)
    jax.block_until_ready(out)
    assert jnp.allclose(out, ref_loss(gt, pr), rtol=1e-5, atol=1e-5), \
        (out, ref_loss(gt, pr))

    # 2) Large batch: exercises the Pallas kernel with zero-copy tiling.
    k3, k4 = jax.random.split(jax.random.PRNGKey(1))
    gt2 = jax.random.normal(k3, (32768, 3), dtype=jnp.float32)
    pr2 = jax.random.normal(k4, (32768, 3), dtype=jnp.float32)
    out2 = mse_loss(gt2, pr2)
    jax.block_until_ready(out2)
    assert jnp.allclose(out2, ref_loss(gt2, pr2), rtol=1e-4, atol=1e-4), \
        (out2, ref_loss(gt2, pr2))

    # 3) Ragged size + multi-step accumulation + jnp tail path.
    k5, k6 = jax.random.split(jax.random.PRNGKey(2))
    gt3 = jax.random.normal(k5, (50000, 3), dtype=jnp.float32)
    pr3 = jax.random.normal(k6, (50000, 3), dtype=jnp.float32)
    out3 = mse_loss(gt3, pr3, block_rows=128)
    jax.block_until_ready(out3)
    assert jnp.allclose(out3, ref_loss(gt3, pr3), rtol=1e-4, atol=1e-4), \
        (out3, ref_loss(gt3, pr3))

    # 4) bf16 inputs stay bf16 in HBM; upcast in-vreg inside the kernel.
    gt4 = gt2.astype(jnp.bfloat16)
    pr4 = pr2.astype(jnp.bfloat16)
    out4 = mse_loss(gt4, pr4)
    jax.block_until_ready(out4)
    assert jnp.allclose(out4, ref_loss(gt4, pr4), rtol=1e-3, atol=1e-3), \
        (out4, ref_loss(gt4, pr4))

    print("KERNEL_OK")
</pallas_src>

<mosaic_0001>
module attributes {stable_mosaic.version = 11 : i64} {
  func.func @_sq_diff_sum_kernel(%arg0: i32, %arg1: i32, %arg2: memref<768x128xf32, #tpu.memory_space<vmem>>, %arg3: memref<768x128xf32, #tpu.memory_space<vmem>>, %arg4: memref<1x1xf32, #tpu.memory_space<vmem>>, %arg5: memref<8x128xf32, #tpu.memory_space<vmem>>) attributes {dimension_semantics = [#tpu.dimension_semantics<parallel>, #tpu.dimension_semantics<arbitrary>], iteration_bounds = array<i64: 1, 1>, scalar_prefetch = 0 : i64, scratch_operands = 1 : i64, tpu.core_type = #tpu.core_type<tc>, window_params = [{transform_indices = @transform_0, window_bounds = array<i64: 768, 128>}, {transform_indices = @transform_1, window_bounds = array<i64: 768, 128>}, {transform_indices = @transform_2, window_bounds = array<i64: 1, 1>}]} {
    %c0_i32 = arith.constant 0 : i32
    %0 = arith.cmpi eq, %arg1, %c0_i32 : i32
    %1 = arith.extui %0 : i1 to i32
    %c0_i32_0 = arith.constant 0 : i32
    %2 = arith.cmpi ne, %1, %c0_i32_0 : i32
    scf.if %2 {
      %cst_10 = arith.constant 0.000000e+00 : f32
      %15 = vector.broadcast %cst_10 : f32 to vector<8x128xf32>
      %c0_11 = arith.constant 0 : index
      %c0_12 = arith.constant 0 : index
      %16 = vector.load %arg5[%c0_11, %c0_12] : memref<8x128xf32, #tpu.memory_space<vmem>>, vector<8x128xf32>
      tpu.vector_store %arg5[%c0_11, %c0_12], %15 {strides = array<i32>} : memref<8x128xf32, #tpu.memory_space<vmem>>, vector<8x128xf32>,
    } else {
    }
    %c0 = arith.constant 0 : index
    %c0_1 = arith.constant 0 : index
    %3 = vector.load %arg2[%c0, %c0_1] : memref<768x128xf32, #tpu.memory_space<vmem>>, vector<768x128xf32>
    %c0_2 = arith.constant 0 : index
    %c0_3 = arith.constant 0 : index
    %4 = vector.load %arg3[%c0_2, %c0_3] : memref<768x128xf32, #tpu.memory_space<vmem>>, vector<768x128xf32>
    %5 = arith.subf %3, %4 : vector<768x128xf32>
    %6 = arith.mulf %5, %5 : vector<768x128xf32>
    %c0_4 = arith.constant 0 : index
    %c0_5 = arith.constant 0 : index
    %7 = vector.load %arg5[%c0_4, %c0_5] : memref<8x128xf32, #tpu.memory_space<vmem>>, vector<8x128xf32>
    %8 = vector.shape_cast %6 : vector<768x128xf32> to vector<96x8x128xf32>
    %cst = arith.constant dense<0.000000e+00> : vector<8x128xf32>
    %9 = vector.multi_reduction <add>, %8, %cst [0] : vector<96x8x128xf32> to vector<8x128xf32>
    %10 = arith.addf %7, %9 : vector<8x128xf32>
    %c0_6 = arith.constant 0 : index
    %c0_7 = arith.constant 0 : index
    %11 = vector.load %arg5[%c0_6, %c0_7] : memref<8x128xf32, #tpu.memory_space<vmem>>, vector<8x128xf32>
    tpu.vector_store %arg5[%c0_6, %c0_7], %10 {strides = array<i32>} : memref<8x128xf32, #tpu.memory_space<vmem>>, vector<8x128xf32>,
    %c0_i32_8 = arith.constant 0 : i32
    %12 = arith.cmpi eq, %arg1, %c0_i32_8 : i32
    %13 = arith.extui %12 : i1 to i32
    %c0_i32_9 = arith.constant 0 : i32
    %14 = arith.cmpi ne, %13, %c0_i32_9 : i32
    scf.if %14 {
      %c0_10 = arith.constant 0 : index
      %c0_11 = arith.constant 0 : index
      %15 = vector.load %arg5[%c0_10, %c0_11] : memref<8x128xf32, #tpu.memory_space<vmem>>, vector<8x128xf32>
      %16 = vector.shape_cast %15 : vector<8x128xf32> to vector<1x8x128xf32>
      %cst_12 = arith.constant dense<0.000000e+00> : vector<1xf32>
      %17 = vector.multi_reduction <add>, %16, %cst_12 [1, 2] : vector<1x8x128xf32> to vector<1xf32>
      %18 = vector.shape_cast %17 : vector<1xf32> to vector<1x1x1xf32>
      %19 = vector.extract %18[0, 0, 0] : f32 from vector<1x1x1xf32>
      %20 = vector.broadcast %19 : f32 to vector<1x1xf32>
      %c0_13 = arith.constant 0 : index
      %c0_14 = arith.constant 0 : index
      %21 = vector.load %arg4[%c0_13, %c0_14] : memref<1x1xf32, #tpu.memory_space<vmem>>, vector<1x1xf32>
      tpu.vector_store %arg4[%c0_13, %c0_14], %20 {strides = array<i32>} : memref<1x1xf32, #tpu.memory_space<vmem>>, vector<1x1xf32>,
    } else {
    }
    return
  }
  func.func @transform_0(%arg0: i32, %arg1: i32) -> (i32, i32) {
    %c1_i32 = arith.constant 1 : i32
    %0 = arith.muli %arg0, %c1_i32 : i32
    %1 = arith.addi %0, %arg1 : i32
    %c0_i32 = arith.constant 0 : i32
    %c0_i32_0 = arith.constant 0 : i32
    return %1, %c0_i32 : i32, i32
  }
  func.func @transform_1(%arg0: i32, %arg1: i32) -> (i32, i32) {
    %c1_i32 = arith.constant 1 : i32
    %0 = arith.muli %arg0, %c1_i32 : i32
    %1 = arith.addi %0, %arg1 : i32
    %c0_i32 = arith.constant 0 : i32
    %c0_i32_0 = arith.constant 0 : i32
    return %1, %c0_i32 : i32, i32
  }
  func.func @transform_2(%arg0: i32, %arg1: i32) -> (i32, i32) {
    %c0_i32 = arith.constant 0 : i32
    %c0_i32_0 = arith.constant 0 : i32
    return %arg0, %c0_i32 : i32, i32
  }
}

</mosaic_0001>

<llo_original>
// kernel: tpu_custom_call.1
$region0: #{tpu_custom_call.1}
  #allocation0 [shape = 'u32[]', space=smem, size = 0x4, offset = 0x4, fixed_abs, tag = 'smem constant byte address 0x4 - core index']
  #allocation1 [shape = 'u32[144,128]{1,0:T(1,128)}', space=vmem, size = 0x12000, scoped, tag = 'internal scratch']
  #allocation2 [shape = 'f32[8,128]{1,0:T(8,128)}', space=vmem, size = 0x1000, scoped, tag = 'scratch operand']
  %s0 = inlined_call_operand.hbm [shape: f32[768,128], index: 0, kind: input, shape index: {}]
  %s1 = inlined_call_operand.hbm [shape: f32[768,128], index: 1, kind: input, shape index: {}]
  %s2 = inlined_call_operand.hbm [shape: f32[1,1], index: 2, kind: output, shape index: {}]
  %s3 = sld [smem:[#allocation0]]
  $region34: #{tpu_custom_call.1} parent=0
    _
  %s5 = ssub.s32 1, %s3
  %s6 = scalar_select 0, %s5, %s3
  $region1: #{tpu_custom_call.1} parent=0
    #allocation3 [shape = 'u8[393216]{0}', space=vmem, size = 0x60000, scoped, tag = 'input window, operand 0, single buffered']
    #allocation4 [shape = 's32[1]{0}', space=sflag, size = 0x4, scoped, tag = 'scoped memory for tpu_custom_call.1']
    #allocation5 [shape = 's32[1]{0}', space=sflag, size = 0x4, scoped, tag = 'scoped memory for tpu_custom_call.1']
    #allocation6 [shape = 'u8[393216]{0}', space=vmem, size = 0x60000, scoped, tag = 'input window, operand 1, single buffered']
    #allocation7 [shape = 's32[1]{0}', space=sflag, size = 0x4, scoped, tag = 'scoped memory for tpu_custom_call.1']
    #allocation8 [shape = 'u8[512]{0}', space=vmem, size = 0x400, scoped, tag = 'output window, operand 0, single buffered']
    %7 = vsyncpa [#allocation4], 0
    %8 = vsyncpa [#allocation7], 0
    %9 = vsyncpa [#allocation5], 0
    // Predicated region
    $region2: #{tpu_custom_call.1} parent=1 // pred_check
      _
    $region3: #{tpu_custom_call.1} parent=1 // pred_check_branch
      %11 = sbr.rel (0) target = $region5
    $region4: #{tpu_custom_call.1} parent=1 // pred_region
      %s12 = sadd.s32 0, 0
      %s13 = smul.u32 96, %s12
      %s15 = ssub.s32 12288, 12288
      %16 = vsyncadd [#allocation4], %s15
      %s17 = smul.addr %s13, 128
      %s18 = scalar_lea.hbm %s0, %s17
      %s19 = sshll.u32 [#allocation3], 4
      %s20 = int_to_ptr.vmem [resolvable:$true] %s19
      %25 = dma.hbm_to_vmem [thread:$0]  %s18, 12288, %s20, [#allocation4], 128, 128, 8
    $region5: #{tpu_custom_call.1} parent=1 // pred_fallthru
      _
    // Predicated region
    $region6: #{tpu_custom_call.1} parent=1 // pred_check
      _
    $region7: #{tpu_custom_call.1} parent=1 // pred_check_branch
      %27 = sbr.rel (0) target = $region9
    $region8: #{tpu_custom_call.1} parent=1 // pred_region
      %s28 = sadd.s32 0, 0
      %s29 = smul.u32 96, %s28
      %s31 = ssub.s32 12288, 12288
      %32 = vsyncadd [#allocation7], %s31
      %s33 = smul.addr %s29, 128
      %s34 = scalar_lea.hbm %s1, %s33
      %s35 = sshll.u32 [#allocation6], 4
      %s36 = int_to_ptr.vmem [resolvable:$true] %s35
      %41 = dma.hbm_to_vmem [thread:$0]  %s34, 12288, %s36, [#allocation7], 128, 128, 8
    $region9: #{tpu_custom_call.1} parent=1 // pred_fallthru
      _
    // Predicated region
    $region10: #{tpu_custom_call.1} parent=1 // pred_check
      _
    $region11: #{tpu_custom_call.1} parent=1 // pred_check_branch
      %43 = sbr.rel (0) target = $region13
    $region12: #{tpu_custom_call.1} parent=1 // pred_region
      %44 = dma.done [#allocation4], 12288
    $region13: #{tpu_custom_call.1} parent=1 // pred_fallthru
      _
    // Predicated region
    $region14: #{tpu_custom_call.1} parent=1 // pred_check
      _
    $region15: #{tpu_custom_call.1} parent=1 // pred_check_branch
      %46 = sbr.rel (0) target = $region17
    $region16: #{tpu_custom_call.1} parent=1 // pred_region
      %47 = dma.done [#allocation7], 12288
    $region17: #{tpu_custom_call.1} parent=1 // pred_fallthru
      _
    %s48 = sadd.s32 0, 0
    %s49 = smul.u32 96, %s48
    %s50 = sadd.s32 0, 0
    %s51 = smul.u32 96, %s50
    %p52 = scmp.eq.s32.totalorder 0, 0
    // Predicated region
    $region18: #{tpu_custom_call.1} parent=1 // pred_check
      %p53 = pneg %p52
    $region19: #{tpu_custom_call.1} parent=1 // pred_check_branch
      %55 = sbr.rel (%p53) target = $region21
    $region20: #{tpu_custom_call.1} parent=1 // pred_region
      %56 = vst [vmem:[#allocation2] sm:$0xff] 0.0
    $region21: #{tpu_custom_call.1} parent=1 // pred_fallthru
      _
    %v57 = vld [vmem:[#allocation3] sm:$0xff]
    %v58 = vld [vmem:[#allocation3 + $0x8] sm:$0xff]
    %v59 = vld [vmem:[#allocation3 + $0x10] sm:$0xff]
    %v60 = vld [vmem:[#allocation3 + $0x18] sm:$0xff]
    %v61 = vld [vmem:[#allocation3 + $0x20] sm:$0xff]
    %v62 = vld [vmem:[#allocation3 + $0x28] sm:$0xff]
    %v63 = vld [vmem:[#allocation3 + $0x30] sm:$0xff]
    %v64 = vld [vmem:[#allocation3 + $0x38] sm:$0xff]
    %v65 = vld [vmem:[#allocation3 + $0x40] sm:$0xff]
    %v66 = vld [vmem:[#allocation3 + $0x48] sm:$0xff]
    %v67 = vld [vmem:[#allocation3 + $0x50] sm:$0xff]
    %v68 = vld [vmem:[#allocation3 + $0x58] sm:$0xff]
    %v69 = vld [vmem:[#allocation3 + $0x60] sm:$0xff]
    %v70 = vld [vmem:[#allocation3 + $0x68] sm:$0xff]
    %v71 = vld [vmem:[#allocation3 + $0x70] sm:$0xff]
    %v72 = vld [vmem:[#allocation3 + $0x78] sm:$0xff]
    %v73 = vld [vmem:[#allocation3 + $0x80] sm:$0xff]
    %v74 = vld [vmem:[#allocation3 + $0x88] sm:$0xff]
    %v75 = vld [vmem:[#allocation3 + $0x90] sm:$0xff]
    %v76 = vld [vmem:[#allocation3 + $0x98] sm:$0xff]
    %v77 = vld [vmem:[#allocation3 + $0xa0] sm:$0xff]
    %v78 = vld [vmem:[#allocation3 + $0xa8] sm:$0xff]
    %v79 = vld [vmem:[#allocation3 + $0xb0] sm:$0xff]
    %v80 = vld [vmem:[#allocation3 + $0xb8] sm:$0xff]
    %v81 = vld [vmem:[#allocation3 + $0xc0] sm:$0xff]
    %v82 = vld [vmem:[#allocation3 + $0xc8] sm:$0xff]
    %v83 = vld [vmem:[#allocation3 + $0xd0] sm:$0xff]
    %v84 = vld [vmem:[#allocation3 + $0xd8] sm:$0xff]
    %v85 = vld [vmem:[#allocation3 + $0xe0] sm:$0xff]
    %v86 = vld [vmem:[#allocation3 + $0xe8] sm:$0xff]
    %v87 = vld [vmem:[#allocation3 + $0xf0] sm:$0xff]
    %v88 = vld [vmem:[#allocation3 + $0xf8] sm:$0xff]
    %v89 = vld [vmem:[#allocation3 + $0x100] sm:$0xff]
    %v90 = vld [vmem:[#allocation3 + $0x108] sm:$0xff]
    %v91 = vld [vmem:[#allocation3 + $0x110] sm:$0xff]
    %v92 = vld [vmem:[#allocation3 + $0x118] sm:$0xff]
    %v93 = vld [vmem:[#allocation3 + $0x120] sm:$0xff]
    %v94 = vld [vmem:[#allocation3 + $0x128] sm:$0xff]
    %v95 = vld [vmem:[#allocation3 + $0x130] sm:$0xff]
    %v96 = vld [vmem:[#allocation3 + $0x138] sm:$0xff]
    %v97 = vld [vmem:[#allocation3 + $0x140] sm:$0xff]
    %v98 = vld [vmem:[#allocation3 + $0x148] sm:$0xff]
    %v99 = vld [vmem:[#allocation3 + $0x150] sm:$0xff]
    %v100 = vld [vmem:[#allocation3 + $0x158] sm:$0xff]
    %v101 = vld [vmem:[#allocation3 + $0x160] sm:$0xff]
    %v102 = vld [vmem:[#allocation3 + $0x168] sm:$0xff]
    %v103 = vld [vmem:[#allocation3 + $0x170] sm:$0xff]
    %v104 = vld [vmem:[#allocation3 + $0x178] sm:$0xff]
    %v105 = vld [vmem:[#allocation3 + $0x180] sm:$0xff]
    %v106 = vld [vmem:[#allocation3 + $0x188] sm:$0xff]
    %v107 = vld [vmem:[#allocation3 + $0x190] sm:$0xff]
    %v108 = vld [vmem:[#allocation3 + $0x198] sm:$0xff]
    %v109 = vld [vmem:[#allocation3 + $0x1a0] sm:$0xff]
    %v110 = vld [vmem:[#allocation3 + $0x1a8] sm:$0xff]
    %v111 = vld [vmem:[#allocation3 + $0x1b0] sm:$0xff]
    %v112 = vld [vmem:[#allocation3 + $0x1b8] sm:$0xff]
    %v113 = vld [vmem:[#allocation3 + $0x1c0] sm:$0xff]
    %v114 = vld [vmem:[#allocation3 + $0x1c8] sm:$0xff]
    %v115 = vld [vmem:[#allocation3 + $0x1d0] sm:$0xff]
    %v116 = vld [vmem:[#allocation3 + $0x1d8] sm:$0xff]
    %v117 = vld [vmem:[#allocation3 + $0x1e0] sm:$0xff]
    %v118 = vld [vmem:[#allocation3 + $0x1e8] sm:$0xff]
    %v119 = vld [vmem:[#allocation3 + $0x1f0] sm:$0xff]
    %v120 = vld [vmem:[#allocation3 + $0x1f8] sm:$0xff]
    %v121 = vld [vmem:[#allocation3 + $0x200] sm:$0xff]
    %v122 = vld [vmem:[#allocation3 + $0x208] sm:$0xff]
    %v123 = vld [vmem:[#allocation3 + $0x210] sm:$0xff]
    %v124 = vld [vmem:[#allocation3 + $0x218] sm:$0xff]
    %v125 = vld [vmem:[#allocation3 + $0x220] sm:$0xff]
    %v126 = vld [vmem:[#allocation3 + $0x228] sm:$0xff]
    %v127 = vld [vmem:[#allocation3 + $0x230] sm:$0xff]
    %v128 = vld [vmem:[#allocation3 + $0x238] sm:$0xff]
    %v129 = vld [vmem:[#allocation3 + $0x240] sm:$0xff]
    %v130 = vld [vmem:[#allocation3 + $0x248] sm:$0xff]
    %v131 = vld [vmem:[#allocation3 + $0x250] sm:$0xff]
    %v132 = vld [vmem:[#allocation3 + $0x258] sm:$0xff]
    %v133 = vld [vmem:[#allocation3 + $0x260] sm:$0xff]
    %v134 = vld [vmem:[#allocation3 + $0x268] sm:$0xff]
    %v135 = vld [vmem:[#allocation3 + $0x270] sm:$0xff]
    %v136 = vld [vmem:[#allocation3 + $0x278] sm:$0xff]
    %v137 = vld [vmem:[#allocation3 + $0x280] sm:$0xff]
    %v138 = vld [vmem:[#allocation3 + $0x288] sm:$0xff]
    %v139 = vld [vmem:[#allocation3 + $0x290] sm:$0xff]
    %v140 = vld [vmem:[#allocation3 + $0x298] sm:$0xff]
    %v141 = vld [vmem:[#allocation3 + $0x2a0] sm:$0xff]
    %v142 = vld [vmem:[#allocation3 + $0x2a8] sm:$0xff]
    %v143 = vld [vmem:[#allocation3 + $0x2b0] sm:$0xff]
    %v144 = vld [vmem:[#allocation3 + $0x2b8] sm:$0xff]
    %v145 = vld [vmem:[#allocation3 + $0x2c0] sm:$0xff]
    %v146 = vld [vmem:[#allocation3 + $0x2c8] sm:$0xff]
    %v147 = vld [vmem:[#allocation3 + $0x2d0] sm:$0xff]
    %v148 = vld [vmem:[#allocation3 + $0x2d8] sm:$0xff]
    %v149 = vld [vmem:[#allocation3 + $0x2e0] sm:$0xff]
    %v150 = vld [vmem:[#allocation3 + $0x2e8] sm:$0xff]
    %v151 = vld [vmem:[#allocation3 + $0x2f0] sm:$0xff]
    %v152 = vld [vmem:[#allocation3 + $0x2f8] sm:$0xff]
    %v153 = vld [vmem:[#allocation6] sm:$0xff]
    %v154 = vld [vmem:[#allocation6 + $0x8] sm:$0xff]
    %v155 = vld [vmem:[#allocation6 + $0x10] sm:$0xff]
    %v156 = vld [vmem:[#allocation6 + $0x18] sm:$0xff]
    %v157 = vld [vmem:[#allocation6 + $0x20] sm:$0xff]
    %v158 = vld [vmem:[#allocation6 + $0x28] sm:$0xff]
    %v159 = vld [vmem:[#allocation6 + $0x30] sm:$0xff]
    %v160 = vld [vmem:[#allocation6 + $0x38] sm:$0xff]
    %v161 = vld [vmem:[#allocation6 + $0x40] sm:$0xff]
    %v162 = vld [vmem:[#allocation6 + $0x48] sm:$0xff]
    %v163 = vld [vmem:[#allocation6 + $0x50] sm:$0xff]
    %v164 = vld [vmem:[#allocation6 + $0x58] sm:$0xff]
    %v165 = vld [vmem:[#allocation6 + $0x60] sm:$0xff]
    %v166 = vld [vmem:[#allocation6 + $0x68] sm:$0xff]
    %v167 = vld [vmem:[#allocation6 + $0x70] sm:$0xff]
    %v168 = vld [vmem:[#allocation6 + $0x78] sm:$0xff]
    %v169 = vld [vmem:[#allocation6 + $0x80] sm:$0xff]
    %v170 = vld [vmem:[#allocation6 + $0x88] sm:$0xff]
    %v171 = vld [vmem:[#allocation6 + $0x90] sm:$0xff]
    %v172 = vld [vmem:[#allocation6 + $0x98] sm:$0xff]
    %v173 = vld [vmem:[#allocation6 + $0xa0] sm:$0xff]
    %v174 = vld [vmem:[#allocation6 + $0xa8] sm:$0xff]
    %v175 = vld [vmem:[#allocation6 + $0xb0] sm:$0xff]
    %v176 = vld [vmem:[#allocation6 + $0xb8] sm:$0xff]
    %v177 = vld [vmem:[#allocation6 + $0xc0] sm:$0xff]
    %v178 = vld [vmem:[#allocation6 + $0xc8] sm:$0xff]
    %v179 = vld [vmem:[#allocation6 + $0xd0] sm:$0xff]
    %v180 = vld [vmem:[#allocation6 + $0xd8] sm:$0xff]
    %v181 = vld [vmem:[#allocation6 + $0xe0] sm:$0xff]
    %v182 = vld [vmem:[#allocation6 + $0xe8] sm:$0xff]
    %v183 = vld [vmem:[#allocation6 + $0xf0] sm:$0xff]
    %v184 = vld [vmem:[#allocation6 + $0xf8] sm:$0xff]
    %v185 = vld [vmem:[#allocation6 + $0x100] sm:$0xff]
    %v186 = vld [vmem:[#allocation6 + $0x108] sm:$0xff]
    %v187 = vld [vmem:[#allocation6 + $0x110] sm:$0xff]
    %v188 = vld [vmem:[#allocation6 + $0x118] sm:$0xff]
    %v189 = vld [vmem:[#allocation6 + $0x120] sm:$0xff]
    %v190 = vld [vmem:[#allocation6 + $0x128] sm:$0xff]
    %v191 = vld [vmem:[#allocation6 + $0x130] sm:$0xff]
    %v192 = vld [vmem:[#allocation6 + $0x138] sm:$0xff]
    %v193 = vld [vmem:[#allocation6 + $0x140] sm:$0xff]
    %v194 = vld [vmem:[#allocation6 + $0x148] sm:$0xff]
    %v195 = vld [vmem:[#allocation6 + $0x150] sm:$0xff]
    %v196 = vld [vmem:[#allocation6 + $0x158] sm:$0xff]
    %v197 = vld [vmem:[#allocation6 + $0x160] sm:$0xff]
    %v198 = vld [vmem:[#allocation6 + $0x168] sm:$0xff]
    %v199 = vld [vmem:[#allocation6 + $0x170] sm:$0xff]
    %v200 = vld [vmem:[#allocation6 + $0x178] sm:$0xff]
    %v201 = vld [vmem:[#allocation6 + $0x180] sm:$0xff]
    %v202 = vld [vmem:[#allocation6 + $0x188] sm:$0xff]
    %v203 = vld [vmem:[#allocation6 + $0x190] sm:$0xff]
    %v204 = vld [vmem:[#allocation6 + $0x198] sm:$0xff]
    %v205 = vld [vmem:[#allocation6 + $0x1a0] sm:$0xff]
    %v206 = vld [vmem:[#allocation6 + $0x1a8] sm:$0xff]
    %v207 = vld [vmem:[#allocation6 + $0x1b0] sm:$0xff]
    %v208 = vld [vmem:[#allocation6 + $0x1b8] sm:$0xff]
    %v209 = vld [vmem:[#allocation6 + $0x1c0] sm:$0xff]
    %v210 = vld [vmem:[#allocation6 + $0x1c8] sm:$0xff]
    %v211 = vld [vmem:[#allocation6 + $0x1d0] sm:$0xff]
    %v212 = vld [vmem:[#allocation6 + $0x1d8] sm:$0xff]
    %v213 = vld [vmem:[#allocation6 + $0x1e0] sm:$0xff]
    %v214 = vld [vmem:[#allocation6 + $0x1e8] sm:$0xff]
    %v215 = vld [vmem:[#allocation6 + $0x1f0] sm:$0xff]
    %v216 = vld [vmem:[#allocation6 + $0x1f8] sm:$0xff]
    %v217 = vld [vmem:[#allocation6 + $0x200] sm:$0xff]
    %v218 = vld [vmem:[#allocation6 + $0x208] sm:$0xff]
    %v219 = vld [vmem:[#allocation6 + $0x210] sm:$0xff]
    %v220 = vld [vmem:[#allocation6 + $0x218] sm:$0xff]
    %v221 = vld [vmem:[#allocation6 + $0x220] sm:$0xff]
    %v222 = vld [vmem:[#allocation6 + $0x228] sm:$0xff]
    %v223 = vld [vmem:[#allocation6 + $0x230] sm:$0xff]
    %v224 = vld [vmem:[#allocation6 + $0x238] sm:$0xff]
    %v225 = vld [vmem:[#allocation6 + $0x240] sm:$0xff]
    %v226 = vld [vmem:[#allocation6 + $0x248] sm:$0xff]
    %v227 = vld [vmem:[#allocation6 + $0x250] sm:$0xff]
    %v228 = vld [vmem:[#allocation6 + $0x258] sm:$0xff]
    %v229 = vld [vmem:[#allocation6 + $0x260] sm:$0xff]
    %v230 = vld [vmem:[#allocation6 + $0x268] sm:$0xff]
    %v231 = vld [vmem:[#allocation6 + $0x270] sm:$0xff]
    %v232 = vld [vmem:[#allocation6 + $0x278] sm:$0xff]
    %v233 = vld [vmem:[#allocation6 + $0x280] sm:$0xff]
    %v234 = vld [vmem:[#allocation6 + $0x288] sm:$0xff]
    %v235 = vld [vmem:[#allocation6 + $0x290] sm:$0xff]
    %v236 = vld [vmem:[#allocation6 + $0x298] sm:$0xff]
    %v237 = vld [vmem:[#allocation6 + $0x2a0] sm:$0xff]
    %v238 = vld [vmem:[#allocation6 + $0x2a8] sm:$0xff]
    %v239 = vld [vmem:[#allocation6 + $0x2b0] sm:$0xff]
    %v240 = vld [vmem:[#allocation6 + $0x2b8] sm:$0xff]
    %v241 = vld [vmem:[#allocation6 + $0x2c0] sm:$0xff]
    %v242 = vld [vmem:[#allocation6 + $0x2c8] sm:$0xff]
    %v243 = vld [vmem:[#allocation6 + $0x2d0] sm:$0xff]
    %v244 = vld [vmem:[#allocation6 + $0x2d8] sm:$0xff]
    %v245 = vld [vmem:[#allocation6 + $0x2e0] sm:$0xff]
    %v246 = vld [vmem:[#allocation6 + $0x2e8] sm:$0xff]
    %v247 = vld [vmem:[#allocation6 + $0x2f0] sm:$0xff]
    %v248 = vld [vmem:[#allocation6 + $0x2f8] sm:$0xff]
    %v249 = vsub.f32 %v57, %v153
    %v250 = vsub.f32 %v58, %v154
    %v251 = vsub.f32 %v59, %v155
    %v252 = vsub.f32 %v60, %v156
    %v253 = vsub.f32 %v61, %v157
    %v254 = vsub.f32 %v62, %v158
    %v255 = vsub.f32 %v63, %v159
    %v256 = vsub.f32 %v64, %v160
    %v257 = vsub.f32 %v65, %v161
    %v258 = vsub.f32 %v66, %v162
    %v259 = vsub.f32 %v67, %v163
    %v260 = vsub.f32 %v68, %v164
    %v261 = vsub.f32 %v69, %v165
    %v262 = vsub.f32 %v70, %v166
    %v263 = vsub.f32 %v71, %v167
    %v264 = vsub.f32 %v72, %v168
    %v265 = vsub.f32 %v73, %v169
    %v266 = vsub.f32 %v74, %v170
    %v267 = vsub.f32 %v75, %v171
    %v268 = vsub.f32 %v76, %v172
    %v269 = vsub.f32 %v77, %v173
    %v270 = vsub.f32 %v78, %v174
    %v271 = vsub.f32 %v79, %v175
    %v272 = vsub.f32 %v80, %v176
    %v273 = vsub.f32 %v81, %v177
    %v274 = vsub.f32 %v82, %v178
    %v275 = vsub.f32 %v83, %v179
    %v276 = vsub.f32 %v84, %v180
    %v277 = vsub.f32 %v85, %v181
    %v278 = vsub.f32 %v86, %v182
    %v279 = vsub.f32 %v87, %v183
    %v280 = vsub.f32 %v88, %v184
    %v281 = vsub.f32 %v89, %v185
    %v282 = vsub.f32 %v90, %v186
    %v283 = vsub.f32 %v91, %v187
    %v284 = vsub.f32 %v92, %v188
    %v285 = vsub.f32 %v93, %v189
    %v286 = vsub.f32 %v94, %v190
    %v287 = vsub.f32 %v95, %v191
    %v288 = vsub.f32 %v96, %v192
    %v289 = vsub.f32 %v97, %v193
    %v290 = vsub.f32 %v98, %v194
    %v291 = vsub.f32 %v99, %v195
    %v292 = vsub.f32 %v100, %v196
    %v293 = vsub.f32 %v101, %v197
    %v294 = vsub.f32 %v102, %v198
    %v295 = vsub.f32 %v103, %v199
    %v296 = vsub.f32 %v104, %v200
    %v297 = vsub.f32 %v105, %v201
    %v298 = vsub.f32 %v106, %v202
    %v299 = vsub.f32 %v107, %v203
    %v300 = vsub.f32 %v108, %v204
    %v301 = vsub.f32 %v109, %v205
    %v302 = vsub.f32 %v110, %v206
    %v303 = vsub.f32 %v111, %v207
    %v304 = vsub.f32 %v112, %v208
    %v305 = vsub.f32 %v113, %v209
    %v306 = vsub.f32 %v114, %v210
    %v307 = vsub.f32 %v115, %v211
    %v308 = vsub.f32 %v116, %v212
    %v309 = vsub.f32 %v117, %v213
    %v310 = vsub.f32 %v118, %v214
    %v311 = vsub.f32 %v119, %v215
    %v312 = vsub.f32 %v120, %v216
    %v313 = vsub.f32 %v121, %v217
    %v314 = vsub.f32 %v122, %v218
    %v315 = vsub.f32 %v123, %v219
    %v316 = vsub.f32 %v124, %v220
    %v317 = vsub.f32 %v125, %v221
    %v318 = vsub.f32 %v126, %v222
    %v319 = vsub.f32 %v127, %v223
    %v320 = vsub.f32 %v128, %v224
    %v321 = vsub.f32 %v129, %v225
    %v322 = vsub.f32 %v130, %v226
    %v323 = vsub.f32 %v131, %v227
    %v324 = vsub.f32 %v132, %v228
    %v325 = vsub.f32 %v133, %v229
    %v326 = vsub.f32 %v134, %v230
    %v327 = vsub.f32 %v135, %v231
    %v328 = vsub.f32 %v136, %v232
    %v329 = vsub.f32 %v137, %v233
    %v330 = vsub.f32 %v138, %v234
    %v331 = vsub.f32 %v139, %v235
    %v332 = vsub.f32 %v140, %v236
    %v333 = vsub.f32 %v141, %v237
    %v334 = vsub.f32 %v142, %v238
    %v335 = vsub.f32 %v143, %v239
    %v336 = vsub.f32 %v144, %v240
    %v337 = vsub.f32 %v145, %v241
    %v338 = vsub.f32 %v146, %v242
    %v339 = vsub.f32 %v147, %v243
    %v340 = vsub.f32 %v148, %v244
    %v341 = vsub.f32 %v149, %v245
    %v342 = vsub.f32 %v150, %v246
    %v343 = vsub.f32 %v151, %v247
    %v344 = vsub.f32 %v152, %v248
    %v345 = vmul.f32 %v249, %v249
    %v346 = vmul.f32 %v250, %v250
    %v347 = vmul.f32 %v251, %v251
    %v348 = vmul.f32 %v252, %v252
    %v349 = vmul.f32 %v253, %v253
    %v350 = vmul.f32 %v254, %v254
    %v351 = vmul.f32 %v255, %v255
    %v352 = vmul.f32 %v256, %v256
    %v353 = vmul.f32 %v257, %v257
    %v354 = vmul.f32 %v258, %v258
    %v355 = vmul.f32 %v259, %v259
    %v356 = vmul.f32 %v260, %v260
    %v357 = vmul.f32 %v261, %v261
    %v358 = vmul.f32 %v262, %v262
    %v359 = vmul.f32 %v263, %v263
    %v360 = vmul.f32 %v264, %v264
    %v361 = vmul.f32 %v265, %v265
    %v362 = vmul.f32 %v266, %v266
    %v363 = vmul.f32 %v267, %v267
    %v364 = vmul.f32 %v268, %v268
    %v365 = vmul.f32 %v269, %v269
    %v366 = vmul.f32 %v270, %v270
    %v367 = vmul.f32 %v271, %v271
    %v368 = vmul.f32 %v272, %v272
    %v369 = vmul.f32 %v273, %v273
    %v370 = vmul.f32 %v274, %v274
    %v371 = vmul.f32 %v275, %v275
    %v372 = vmul.f32 %v276, %v276
    %v373 = vmul.f32 %v277, %v277
    %v374 = vmul.f32 %v278, %v278
    %v375 = vmul.f32 %v279, %v279
    %v376 = vmul.f32 %v280, %v280
    %v377 = vmul.f32 %v281, %v281
    %v378 = vmul.f32 %v282, %v282
    %v379 = vmul.f32 %v283, %v283
    %v380 = vmul.f32 %v284, %v284
    %v381 = vmul.f32 %v285, %v285
    %v382 = vmul.f32 %v286, %v286
    %v383 = vmul.f32 %v287, %v287
    %v384 = vmul.f32 %v288, %v288
    %v385 = vmul.f32 %v289, %v289
    %v386 = vmul.f32 %v290, %v290
    %v387 = vmul.f32 %v291, %v291
    %v388 = vmul.f32 %v292, %v292
    %v389 = vmul.f32 %v293, %v293
    %v390 = vmul.f32 %v294, %v294
    %v391 = vmul.f32 %v295, %v295
    %v392 = vmul.f32 %v296, %v296
    %v393 = vmul.f32 %v297, %v297
    %v394 = vmul.f32 %v298, %v298
    %v395 = vmul.f32 %v299, %v299
    %v396 = vmul.f32 %v300, %v300
    %v397 = vmul.f32 %v301, %v301
    %v398 = vmul.f32 %v302, %v302
    %v399 = vmul.f32 %v303, %v303
    %v400 = vmul.f32 %v304, %v304
    %v401 = vmul.f32 %v305, %v305
    %v402 = vmul.f32 %v306, %v306
    %v403 = vmul.f32 %v307, %v307
    %v404 = vmul.f32 %v308, %v308
    %v405 = vmul.f32 %v309, %v309
    %v406 = vmul.f32 %v310, %v310
    %v407 = vmul.f32 %v311, %v311
    %v408 = vmul.f32 %v312, %v312
    %v409 = vmul.f32 %v313, %v313
    %v410 = vmul.f32 %v314, %v314
    %v411 = vmul.f32 %v315, %v315
    %v412 = vmul.f32 %v316, %v316
    %v413 = vmul.f32 %v317, %v317
    %v414 = vmul.f32 %v318, %v318
    %v415 = vmul.f32 %v319, %v319
    %v416 = vmul.f32 %v320, %v320
    %v417 = vmul.f32 %v321, %v321
    %v418 = vmul.f32 %v322, %v322
    %v419 = vmul.f32 %v323, %v323
    %v420 = vmul.f32 %v324, %v324
    %v421 = vmul.f32 %v325, %v325
    %v422 = vmul.f32 %v326, %v326
    %v423 = vmul.f32 %v327, %v327
    %v424 = vmul.f32 %v328, %v328
    %v425 = vmul.f32 %v329, %v329
    %v426 = vmul.f32 %v330, %v330
    %v427 = vmul.f32 %v331, %v331
    %v428 = vmul.f32 %v332, %v332
    %v429 = vmul.f32 %v333, %v333
    %v430 = vmul.f32 %v334, %v334
    %v431 = vmul.f32 %v335, %v335
    %v432 = vmul.f32 %v336, %v336
    %v433 = vmul.f32 %v337, %v337
    %v434 = vmul.f32 %v338, %v338
    %v435 = vmul.f32 %v339, %v339
    %v436 = vmul.f32 %v340, %v340
    %v437 = vmul.f32 %v341, %v341
    %v438 = vmul.f32 %v342, %v342
    %v439 = vmul.f32 %v343, %v343
    %v440 = vmul.f32 %v344, %v344
    %v441 = vld [vmem:[#allocation2] sm:$0xff]
    %v442 = vadd.f32 %v345, %v346
    %v443 = vadd.f32 %v442, %v347
    %v444 = vadd.f32 %v443, %v348
    %v445 = vadd.f32 %v444, %v349
    %v446 = vadd.f32 %v445, %v350
    %v447 = vadd.f32 %v446, %v351
    %v448 = vadd.f32 %v447, %v352
    %v449 = vadd.f32 %v448, %v353
    %v450 = vadd.f32 %v449, %v354
    %v451 = vadd.f32 %v450, %v355
    %v452 = vadd.f32 %v451, %v356
    %v453 = vadd.f32 %v452, %v357
    %v454 = vadd.f32 %v453, %v358
    %v455 = vadd.f32 %v454, %v359
    %v456 = vadd.f32 %v455, %v360
    %v457 = vadd.f32 %v456, %v361
    %v458 = vadd.f32 %v457, %v362
    %v459 = vadd.f32 %v458, %v363
    %v460 = vadd.f32 %v459, %v364
    %v461 = vadd.f32 %v460, %v365
    %v462 = vadd.f32 %v461, %v366
    %v463 = vadd.f32 %v462, %v367
    %v464 = vadd.f32 %v463, %v368
    %v465 = vadd.f32 %v464, %v369
    %v466 = vadd.f32 %v465, %v370
    %v467 = vadd.f32 %v466, %v371
    %v468 = vadd.f32 %v467, %v372
    %v469 = vadd.f32 %v468, %v373
    %v470 = vadd.f32 %v469, %v374
    %v471 = vadd.f32 %v470, %v375
    %v472 = vadd.f32 %v471, %v376
    %v473 = vadd.f32 %v472, %v377
    %v474 = vadd.f32 %v473, %v378
    %v475 = vadd.f32 %v474, %v379
    %v476 = vadd.f32 %v475, %v380
    %v477 = vadd.f32 %v476, %v381
    %v478 = vadd.f32 %v477, %v382
    %v479 = vadd.f32 %v478, %v383
    %v480 = vadd.f32 %v479, %v384
    %v481 = vadd.f32 %v480, %v385
    %v482 = vadd.f32 %v481, %v386
    %v483 = vadd.f32 %v482, %v387
    %v484 = vadd.f32 %v483, %v388
    %v485 = vadd.f32 %v484, %v389
    %v486 = vadd.f32 %v485, %v390
    %v487 = vadd.f32 %v486, %v391
    %v488 = vadd.f32 %v487, %v392
    %v489 = vadd.f32 %v488, %v393
    %v490 = vadd.f32 %v489, %v394
    %v491 = vadd.f32 %v490, %v395
    %v492 = vadd.f32 %v491, %v396
    %v493 = vadd.f32 %v492, %v397
    %v494 = vadd.f32 %v493, %v398
    %v495 = vadd.f32 %v494, %v399
    %v496 = vadd.f32 %v495, %v400
    %v497 = vadd.f32 %v496, %v401
    %v498 = vadd.f32 %v497, %v402
    %v499 = vadd.f32 %v498, %v403
    %v500 = vadd.f32 %v499, %v404
    %v501 = vadd.f32 %v500, %v405
    %v502 = vadd.f32 %v501, %v406
    %v503 = vadd.f32 %v502, %v407
    %v504 = vadd.f32 %v503, %v408
    %v505 = vadd.f32 %v504, %v409
    %v506 = vadd.f32 %v505, %v410
    %v507 = vadd.f32 %v506, %v411
    %v508 = vadd.f32 %v507, %v412
    %v509 = vadd.f32 %v508, %v413
    %v510 = vadd.f32 %v509, %v414
    %v511 = vadd.f32 %v510, %v415
    %v512 = vadd.f32 %v511, %v416
    %v513 = vadd.f32 %v512, %v417
    %v514 = vadd.f32 %v513, %v418
    %v515 = vadd.f32 %v514, %v419
    %v516 = vadd.f32 %v515, %v420
    %v517 = vadd.f32 %v516, %v421
    %v518 = vadd.f32 %v517, %v422
    %v519 = vadd.f32 %v518, %v423
    %v520 = vadd.f32 %v519, %v424
    %v521 = vadd.f32 %v520, %v425
    %v522 = vadd.f32 %v521, %v426
    %v523 = vadd.f32 %v522, %v427
    %v524 = vadd.f32 %v523, %v428
    %v525 = vadd.f32 %v524, %v429
    %v526 = vadd.f32 %v525, %v430
    %v527 = vadd.f32 %v526, %v431
    %v528 = vadd.f32 %v527, %v432
    %v529 = vadd.f32 %v528, %v433
    %v530 = vadd.f32 %v529, %v434
    %v531 = vadd.f32 %v530, %v435
    %v532 = vadd.f32 %v531, %v436
    %v533 = vadd.f32 %v532, %v437
    %v534 = vadd.f32 %v533, %v438
    %v535 = vadd.f32 %v534, %v439
    %v536 = vadd.f32 %v535, %v440
    %v537 = vadd.f32 %v441, %v536
    %538 = vst [vmem:[#allocation2] sm:$0xff] %v537
    // Predicated region
    $region22: #{tpu_custom_call.1} parent=1 // pred_check
      %p539 = pneg %p52
    $region23: #{tpu_custom_call.1} parent=1 // pred_check_branch
      %541 = sbr.rel (%p539) target = $region25
    $region24: #{tpu_custom_call.1} parent=1 // pred_region
      %v542 = vld [vmem:[#allocation2] sm:$0xff]
      %543 = vadd.xlane.f32.xlu0 %v542
      %v544 = vpop.xlane.xlu0 %543
      %v545 = vrot.slane %v544, 4
      %v546 = vadd.f32 %v544, %v545
      %v547 = vrot.slane %v546, 2
      %v548 = vadd.f32 %v546, %v547
      %v549 = vrot.slane %v548, 1
      %v550 = vadd.f32 %v548, %v549
      %s551 = vtos %v550
      %v552 = vstv %s551
      %vm553 = vcmask 0
      %554 = vst.msk [vmem:[#allocation8] sm:$0x1] %vm553, %v552
    $region25: #{tpu_custom_call.1} parent=1 // pred_fallthru
      _
    // Predicated region
    $region26: #{tpu_custom_call.1} parent=1 // pred_check
      _
    $region27: #{tpu_custom_call.1} parent=1 // pred_check_branch
      %556 = sbr.rel (0) target = $region29
    $region28: #{tpu_custom_call.1} parent=1 // pred_region
      %s558 = ssub.s32 16, 16
      %559 = vsyncadd [#allocation5], %s558
      %s561 = sshll.u32 [#allocation8], 4
      %s562 = int_to_ptr.vmem [resolvable:$true] %s561
      %564 = dma.vmem_to_hbm [thread:$0]  %s562, 16, %s2, [#allocation5]
    $region29: #{tpu_custom_call.1} parent=1 // pred_fallthru
      _
    // Predicated region
    $region30: #{tpu_custom_call.1} parent=1 // pred_check
      _
    $region31: #{tpu_custom_call.1} parent=1 // pred_check_branch
      %566 = sbr.rel (0) target = $region33
    $region32: #{tpu_custom_call.1} parent=1 // pred_region
      %567 = dma.done [#allocation5], 16
    $region33: #{tpu_custom_call.1} parent=1 // pred_fallthru
      _
    %568 = vsyncpa [#allocation4], 1
    %569 = vsyncpa [#allocation7], 1
    %570 = vsyncpa [#allocation5], 1

</llo_original>
